<compile_context>
chip_gen: v7x
topology: tpu7x:2x2x1
jax: 0.10.0
libtpu: 0.0.40
codegen_flags: <defaults>
</compile_context>

<pallas_src>
import functools
import math

import jax
import jax.numpy as jnp
from jax import lax
from jax.scipy.special import erf as jax_erf
from jax.experimental import pallas as pl
from jax.experimental.pallas import tpu as pltpu

# Safe scoped-VMEM limit on v5e/v6e/v7x. TODO(synk): re-derive tile sizes / this limit
# for very large K (>= 4096) bf16 tiles on v7x (64 MiB physical VMEM).
_VMEM_LIMIT = 32 * 1024 * 1024


# ----------------------------------------------------------------------------
# helpers
# ----------------------------------------------------------------------------
def _pick_tile(dim, candidates):
    """Largest candidate that evenly divides `dim`, else the full dim (no padding)."""
    for c in candidates:
        if c <= dim and dim % c == 0:
            return c
    return dim


def _erf_f32(x):
    """Abramowitz & Stegun 7.1.26 erf approximation (|err| < 1.5e-7), f32."""
    p = 0.3275911
    a1, a2, a3, a4, a5 = (0.254829592, -0.284496736, 1.421413741,
                          -1.453152027, 1.061405429)
    sign = jnp.where(x >= 0.0, 1.0, -1.0)
    ax = jnp.abs(x)
    t = 1.0 / (1.0 + p * ax)
    poly = ((((a5 * t + a4) * t + a3) * t + a2) * t + a1) * t
    return sign * (1.0 - poly * jnp.exp(-ax * ax))


def _gelu_f32(x):
    # BERT gelu: x * 0.5 * (1 + erf(x / sqrt(2)))
    return x * 0.5 * (1.0 + _erf_f32(x * (1.0 / math.sqrt(2.0))))


# ----------------------------------------------------------------------------
# Kernel 1: dense (x @ W + b), K kept whole, optional fused GELU
# ----------------------------------------------------------------------------
def _dense_kernel(x_ref, w_ref, b_ref, o_ref, *, activation):
    # Native-dtype operands on the MXU, f32 accumulation, f32 epilogue.
    y = jnp.dot(x_ref[...], w_ref[...], preferred_element_type=jnp.float32)
    y = y + b_ref[...].astype(jnp.float32)
    if activation == "gelu":
        y = _gelu_f32(y)
    o_ref[...] = y.astype(o_ref.dtype)


def dense(x, w, b, *, activation=None, out_dtype=None):
    """y = x @ w + b, w stored as (in_features, out_features). K fits VMEM -> no k axis."""
    M, K = x.shape
    K2, N = w.shape
    assert K == K2
    out_dtype = out_dtype or x.dtype
    tm = _pick_tile(M, (512, 256, 128, 64, 32, 16, 8))
    tn = _pick_tile(N, (512, 256, 128))
    b2 = b.reshape(1, N)
    return pl.pallas_call(
        functools.partial(_dense_kernel, activation=activation),
        out_shape=jax.ShapeDtypeStruct((M, N), out_dtype),
        grid_spec=pltpu.PrefetchScalarGridSpec(
            num_scalar_prefetch=0,
            grid=(M // tm, N // tn),
            in_specs=[
                pl.BlockSpec((tm, K), lambda i, j: (i, 0)),
                pl.BlockSpec((K, tn), lambda i, j: (0, j)),
                pl.BlockSpec((1, tn), lambda i, j: (0, j)),
            ],
            out_specs=pl.BlockSpec((tm, tn), lambda i, j: (i, j)),
        ),
        compiler_params=pltpu.CompilerParams(
            dimension_semantics=("parallel", "parallel"),
            vmem_limit_bytes=_VMEM_LIMIT,
        ),
    )(x, w, b2)


# ----------------------------------------------------------------------------
# Kernel 2: dense + residual add + TF-style LayerNorm fused in one epilogue
# ----------------------------------------------------------------------------
def _dense_res_ln_kernel(x_ref, w_ref, b_ref, r_ref, g_ref, beta_ref, o_ref, *, eps):
    y = jnp.dot(x_ref[...], w_ref[...], preferred_element_type=jnp.float32)
    y = y + b_ref[...].astype(jnp.float32) + r_ref[...].astype(jnp.float32)
    # Two-pass LayerNorm (mean, then centered variance): matches the reference and
    # avoids E[x^2]-E[x]^2 cancellation.
    mean = jnp.mean(y, axis=-1, keepdims=True)
    c = y - mean
    var = jnp.mean(c * c, axis=-1, keepdims=True)
    inv = lax.rsqrt(var + eps)
    o_ref[...] = (g_ref[...].astype(jnp.float32) * (c * inv)
                  + beta_ref[...].astype(jnp.float32)).astype(o_ref.dtype)


def dense_residual_layernorm(x, w, b, residual, ln_w, ln_b, *, eps=1e-12, out_dtype=None):
    """LayerNorm(x @ w + b + residual) fused into the dense epilogue (tn = N)."""
    M, K = x.shape
    K2, N = w.shape
    assert K == K2 and residual.shape == (M, N)
    out_dtype = out_dtype or residual.dtype
    tm = _pick_tile(M, (512, 256, 128, 64, 32, 16, 8))
    b2 = b.reshape(1, N)
    g2 = ln_w.reshape(1, N)
    beta2 = ln_b.reshape(1, N)
    return pl.pallas_call(
        functools.partial(_dense_res_ln_kernel, eps=eps),
        out_shape=jax.ShapeDtypeStruct((M, N), out_dtype),
        grid_spec=pltpu.PrefetchScalarGridSpec(
            num_scalar_prefetch=0,
            grid=(M // tm,),
            in_specs=[
                pl.BlockSpec((tm, K), lambda i: (i, 0)),
                pl.BlockSpec((K, N), lambda i: (0, 0)),
                pl.BlockSpec((1, N), lambda i: (0, 0)),
                pl.BlockSpec((tm, N), lambda i: (i, 0)),
                pl.BlockSpec((1, N), lambda i: (0, 0)),
                pl.BlockSpec((1, N), lambda i: (0, 0)),
            ],
            out_specs=pl.BlockSpec((tm, N), lambda i: (i, 0)),
        ),
        compiler_params=pltpu.CompilerParams(
            dimension_semantics=("parallel",),
            vmem_limit_bytes=_VMEM_LIMIT,
        ),
    )(x, w, b2, residual, g2, beta2)


# ----------------------------------------------------------------------------
# Kernel 3: attention over head-groups, directly in (B, S, H) layout
# ----------------------------------------------------------------------------
def _attention_kernel(q_ref, k_ref, v_ref, m_ref, o_ref, *, heads, head_dim, scale):
    # Fold scale into q (touches S*D elements, not the S*S score matrix).
    q_all = q_ref[0] * jnp.asarray(scale, q_ref.dtype)   # (S, heads*hd), native dtype
    k_all = k_ref[0]
    v_all = v_ref[0]
    mask = m_ref[0, 0].astype(jnp.float32)                # (1, S), additive (0 / -10000)
    outs = []
    for g in range(heads):
        sl = slice(g * head_dim, (g + 1) * head_dim)
        qg, kg, vg = q_all[:, sl], k_all[:, sl], v_all[:, sl]
        # q @ k^T, contracting on head_dim; native-dtype MXU operands, f32 result.
        scores = lax.dot_general(
            qg, kg, dimension_numbers=(((1,), (1,)), ((), ())),
            preferred_element_type=jnp.float32) + mask
        scores = scores - jnp.max(scores, axis=-1, keepdims=True)
        p = jnp.exp(scores)
        l = jnp.sum(p, axis=-1, keepdims=True)
        # EUP approximate reciprocal + one Newton step (off the VPU divide path, ~f32).
        inv = pl.reciprocal(l, approx=True)
        inv = inv * (2.0 - l * inv)
        ctx = jnp.dot(p.astype(vg.dtype), vg, preferred_element_type=jnp.float32) * inv
        outs.append(ctx)
        # TODO(synk): attention-probs dropout is an eval-mode identity here.
    o_ref[0] = jnp.concatenate(outs, axis=-1).astype(o_ref.dtype)


def attention_core(q, k, v, attention_mask, *, num_heads, out_dtype=None):
    """softmax(q k^T / sqrt(hd) + mask) @ v with q/k/v/output in (B, S, H) layout."""
    B, S, H = q.shape
    hd = H // num_heads
    out_dtype = out_dtype or q.dtype
    # Heads per block: smallest group whose lane width is a multiple of 128
    # (e.g. 2 heads for hd=64), else all heads (block then spans the full last dim).
    g = num_heads
    for cand in range(1, num_heads + 1):
        if num_heads % cand == 0 and (cand * hd) % 128 == 0:
            g = cand
            break
    ghd = g * hd
    n_groups = num_heads // g
    scale = 1.0 / math.sqrt(hd)

    def qkv_map(i):
        return (i // n_groups, 0, i % n_groups)

    def mask_map(i):
        return (i // n_groups, 0, 0, 0)

    # TODO(synk): for long sequences (S >= ~1024) switch to a KV-tiled online-softmax
    # (flash-style) variant instead of materializing the full SxS score matrix.
    return pl.pallas_call(
        functools.partial(_attention_kernel, heads=g, head_dim=hd, scale=scale),
        out_shape=jax.ShapeDtypeStruct((B, S, H), out_dtype),
        grid_spec=pltpu.PrefetchScalarGridSpec(
            num_scalar_prefetch=0,
            grid=(B * n_groups,),   # single flattened parallel axis (balances v7x TCs)
            in_specs=[
                pl.BlockSpec((1, S, ghd), qkv_map),
                pl.BlockSpec((1, S, ghd), qkv_map),
                pl.BlockSpec((1, S, ghd), qkv_map),
                pl.BlockSpec((1, 1, 1, S), mask_map),
            ],
            out_specs=pl.BlockSpec((1, S, ghd), qkv_map),
        ),
        compiler_params=pltpu.CompilerParams(
            dimension_semantics=("parallel",),
            vmem_limit_bytes=_VMEM_LIMIT,
        ),
    )(q, k, v, attention_mask)


# ----------------------------------------------------------------------------
# BertLayer / BertEncoder wiring (Pallas path)
# ----------------------------------------------------------------------------
def bert_layer(hidden_states, attention_mask, p, *, num_heads):
    B, S, H = hidden_states.shape
    x2 = hidden_states.reshape(B * S, H)

    # --- BertSelfAttention: fused QKV projection (x read from HBM once) ---
    qkv = dense(x2, p["qkv_w"], p["qkv_b"]).reshape(B, S, 3 * H)
    q = qkv[:, :, :H]
    k = qkv[:, :, H:2 * H]
    v = qkv[:, :, 2 * H:]

    # Attention directly in (B, S, H) layout — no head split/merge transposes.
    ctx = attention_core(q, k, v, attention_mask, num_heads=num_heads)
    ctx2 = ctx.reshape(B * S, H)

    # --- BertSelfOutput: dense + (dropout=id) + residual + LayerNorm, fused ---
    attn = dense_residual_layernorm(ctx2, p["ao_w"], p["ao_b"], x2,
                                    p["ln1_w"], p["ln1_b"])

    # --- BertIntermediate: dense with fused exact-erf GELU ---
    inter = dense(attn, p["i_w"], p["i_b"], activation="gelu")

    # --- BertOutput: dense + (dropout=id) + residual + LayerNorm, fused ---
    out = dense_residual_layernorm(inter, p["o_w"], p["o_b"], attn,
                                   p["ln2_w"], p["ln2_b"])
    return out.reshape(B, S, H)


def bert_encoder(hidden_states, attention_mask, layer_params, *, num_heads,
                 output_all_encoded_layers=True):
    all_encoder_layers = []
    all_attention_matrices = []
    for p in layer_params:
        hidden_states = bert_layer(hidden_states, attention_mask, p,
                                   num_heads=num_heads)
        if output_all_encoded_layers:
            all_encoder_layers.append(hidden_states)
            # TODO(synk): attention matrices (get_attention_matrices=True) are not
            # materialized by the fused attention kernel; None matches the default path.
            all_attention_matrices.append(None)
    if not output_all_encoded_layers:
        all_encoder_layers.append(hidden_states)
        all_attention_matrices.append(None)
    return all_encoder_layers, all_attention_matrices


# ----------------------------------------------------------------------------
# Deterministic parameter init (copy.deepcopy semantics: all layers identical)
# ----------------------------------------------------------------------------
def init_bert_layer_params(key, hidden, intermediate):
    ks = jax.random.split(key, 6)

    def w(k, fi, fo):  # stored as (in_features, out_features)
        return jax.random.normal(k, (fi, fo), jnp.float32) * 0.02

    z = lambda n: jnp.zeros((n,), jnp.float32)
    o = lambda n: jnp.ones((n,), jnp.float32)
    return {
        "q_w": w(ks[0], hidden, hidden), "q_b": z(hidden),
        "k_w": w(ks[1], hidden, hidden), "k_b": z(hidden),
        "v_w": w(ks[2], hidden, hidden), "v_b": z(hidden),
        "ao_w": w(ks[3], hidden, hidden), "ao_b": z(hidden),
        "ln1_w": o(hidden), "ln1_b": z(hidden),
        "i_w": w(ks[4], hidden, intermediate), "i_b": z(intermediate),
        "o_w": w(ks[5], intermediate, hidden), "o_b": z(hidden),
        "ln2_w": o(hidden), "ln2_b": z(hidden),
    }


def to_pallas_params(p, dtype=None):
    """Build the fused-QKV parameter dict used by the Pallas path."""
    out = {k: v for k, v in p.items() if not k.startswith(("q_", "k_", "v_"))}
    out["qkv_w"] = jnp.concatenate([p["q_w"], p["k_w"], p["v_w"]], axis=1)
    out["qkv_b"] = jnp.concatenate([p["q_b"], p["k_b"], p["v_b"]], axis=0)
    if dtype is not None:
        out = {k: v.astype(dtype) for k, v in out.items()}
    return out


# ----------------------------------------------------------------------------
# Pure-JAX reference (same math as the PyTorch module, dropout in eval mode)
# ----------------------------------------------------------------------------
def reference_encoder(hidden_states, attention_mask, layer_params, *, num_heads):
    def ln(x, w, b, eps=1e-12):
        u = jnp.mean(x, axis=-1, keepdims=True)
        s = jnp.mean((x - u) ** 2, axis=-1, keepdims=True)
        return w * ((x - u) / jnp.sqrt(s + eps)) + b

    def gelu(x):
        return x * 0.5 * (1.0 + jax_erf(x / jnp.sqrt(2.0)))

    outs = []
    h = hidden_states
    for p in layer_params:
        B, S, H = h.shape
        hd = H // num_heads
        x2 = h.reshape(B * S, H)
        q = (x2 @ p["q_w"] + p["q_b"]).reshape(B, S, num_heads, hd).transpose(0, 2, 1, 3)
        k = (x2 @ p["k_w"] + p["k_b"]).reshape(B, S, num_heads, hd).transpose(0, 2, 1, 3)
        v = (x2 @ p["v_w"] + p["v_b"]).reshape(B, S, num_heads, hd).transpose(0, 2, 1, 3)
        scores = jnp.einsum("bhqd,bhkd->bhqk", q, k) / math.sqrt(hd) + attention_mask
        probs = jax.nn.softmax(scores, axis=-1)
        ctx = jnp.einsum("bhqk,bhkd->bhqd", probs, v).transpose(0, 2, 1, 3).reshape(B * S, H)
        attn = ln(ctx @ p["ao_w"] + p["ao_b"] + x2, p["ln1_w"], p["ln1_b"])
        inter = gelu(attn @ p["i_w"] + p["i_b"])
        out = ln(inter @ p["o_w"] + p["o_b"] + attn, p["ln2_w"], p["ln2_b"])
        h = out.reshape(B, S, H)
        outs.append(h)
    return outs


if __name__ == "__main__":
    key = jax.random.PRNGKey(0)
    batch, seq, hidden, num_heads, num_layers = 2, 8, 32, 4, 2
    intermediate = 4 * hidden

    k_x, k_p = jax.random.split(key)
    hidden_states = jax.random.normal(k_x, (batch, seq, hidden), dtype=jnp.float32)

    # Additive attention mask (B, 1, 1, S): 0 for valid tokens, -10000 for padding.
    lengths = jnp.array([seq, seq - 2])
    valid = jnp.arange(seq)[None, :] < lengths[:, None]
    attention_mask = jnp.where(valid, 0.0, -10000.0).astype(jnp.float32)[:, None, None, :]

    # copy.deepcopy(layer) in the reference => every layer starts with identical weights.
    layer_p = init_bert_layer_params(k_p, hidden, intermediate)
    layer_params_ref = [layer_p] * num_layers

    # --- f32 Pallas path vs f32 reference ---
    pallas_params_f32 = [to_pallas_params(layer_p)] * num_layers
    all_layers, all_attn = bert_encoder(hidden_states, attention_mask, pallas_params_f32,
                                        num_heads=num_heads)
    jax.block_until_ready(all_layers[-1])

    ref_layers = reference_encoder(hidden_states, attention_mask, layer_params_ref,
                                   num_heads=num_heads)
    for got, want in zip(all_layers, ref_layers):
        max_diff = jnp.max(jnp.abs(got - want))
        assert jnp.allclose(got, want, atol=2e-3, rtol=2e-3), \
            f"f32 mismatch vs reference (max abs diff {max_diff})"

    # --- bf16 weights/activations (f32 accumulation + f32 softmax/LN inside kernels) ---
    pallas_params_bf16 = [to_pallas_params(layer_p, jnp.bfloat16)] * num_layers
    bf16_layers, _ = bert_encoder(hidden_states.astype(jnp.bfloat16), attention_mask,
                                  pallas_params_bf16, num_heads=num_heads)
    out_bf16 = jax.block_until_ready(bf16_layers[-1]).astype(jnp.float32)
    assert bool(jnp.all(jnp.isfinite(out_bf16))), "bf16 path produced non-finite values"
    bf16_diff = jnp.max(jnp.abs(out_bf16 - ref_layers[-1]))
    assert bf16_diff < 0.25, f"bf16 path diverged from f32 reference (max abs diff {bf16_diff})"

    print("KERNEL_OK")
</pallas_src>

<mosaic_0001>
module attributes {stable_mosaic.version = 11 : i64} {
  func.func @_dense_kernel(%arg0: i32, %arg1: i32, %arg2: memref<16x32xf32, #tpu.memory_space<vmem>>, %arg3: memref<32x96xf32, #tpu.memory_space<vmem>>, %arg4: memref<1x96xf32, #tpu.memory_space<vmem>>, %arg5: memref<16x96xf32, #tpu.memory_space<vmem>>) attributes {dimension_semantics = [#tpu.dimension_semantics<parallel>, #tpu.dimension_semantics<parallel>], iteration_bounds = array<i64: 1, 1>, scalar_prefetch = 0 : i64, scratch_operands = 0 : i64, tpu.core_type = #tpu.core_type<tc>, window_params = [{transform_indices = @transform_0, window_bounds = array<i64: 16, 32>}, {transform_indices = @transform_1, window_bounds = array<i64: 32, 96>}, {transform_indices = @transform_2, window_bounds = array<i64: 1, 96>}, {transform_indices = @transform_3, window_bounds = array<i64: 16, 96>}]} {
    %c0 = arith.constant 0 : index
    %c0_0 = arith.constant 0 : index
    %0 = vector.load %arg2[%c0, %c0_0] : memref<16x32xf32, #tpu.memory_space<vmem>>, vector<16x32xf32>
    %c0_1 = arith.constant 0 : index
    %c0_2 = arith.constant 0 : index
    %1 = vector.load %arg3[%c0_1, %c0_2] : memref<32x96xf32, #tpu.memory_space<vmem>>, vector<32x96xf32>
    %cst = arith.constant dense<0.000000e+00> : vector<16x96xf32>
    %2 = tpu.matmul %0, %1, %cst {dimension_numbers = #tpu.dot_dimension_numbers<[1], [0], [0], [1], [0, 0, 1, 1], [], []>} : vector<16x32xf32>, vector<32x96xf32>, vector<16x96xf32> -> vector<16x96xf32>
    %c0_3 = arith.constant 0 : index
    %c0_4 = arith.constant 0 : index
    %3 = vector.load %arg4[%c0_3, %c0_4] : memref<1x96xf32, #tpu.memory_space<vmem>>, vector<1x96xf32>
    %4 = vector.broadcast %3 : vector<1x96xf32> to vector<16x96xf32>
    %5 = arith.addf %2, %4 : vector<16x96xf32>
    %c0_5 = arith.constant 0 : index
    %c0_6 = arith.constant 0 : index
    %6 = vector.load %arg5[%c0_5, %c0_6] : memref<16x96xf32, #tpu.memory_space<vmem>>, vector<16x96xf32>
    tpu.vector_store %arg5[%c0_5, %c0_6], %5 {strides = array<i32>} : memref<16x96xf32, #tpu.memory_space<vmem>>, vector<16x96xf32>,
    return
  }
  func.func @transform_0(%arg0: i32, %arg1: i32) -> (i32, i32) {
    %c0_i32 = arith.constant 0 : i32
    %c0_i32_0 = arith.constant 0 : i32
    return %arg0, %c0_i32 : i32, i32
  }
  func.func @transform_1(%arg0: i32, %arg1: i32) -> (i32, i32) {
    %c0_i32 = arith.constant 0 : i32
    %c0_i32_0 = arith.constant 0 : i32
    return %c0_i32, %arg1 : i32, i32
  }
  func.func @transform_2(%arg0: i32, %arg1: i32) -> (i32, i32) {
    %c0_i32 = arith.constant 0 : i32
    %c0_i32_0 = arith.constant 0 : i32
    return %c0_i32, %arg1 : i32, i32
  }
  func.func @transform_3(%arg0: i32, %arg1: i32) -> (i32, i32) {
    %c0_i32 = arith.constant 0 : i32
    return %arg0, %arg1 : i32, i32
  }
}

</mosaic_0001>

<llo_original>
// kernel: tpu_custom_call.1
$region0: #{tpu_custom_call.1}
  #allocation0 [shape = 'u32[]', space=smem, size = 0x4, offset = 0x4, fixed_abs, tag = 'smem constant byte address 0x4 - core index']
  #allocation1 [shape = 'u32[144,128]{1,0:T(1,128)}', space=vmem, size = 0x12000, scoped, tag = 'internal scratch']
  %s0 = inlined_call_operand.hbm [shape: f32[16,32], index: 0, kind: input, shape index: {}]
  %s1 = inlined_call_operand.hbm [shape: f32[32,96], index: 1, kind: input, shape index: {}]
  %s2 = inlined_call_operand.vmem [shape: f32[1,96], index: 2, kind: input, shape index: {}]
  %s3 = inlined_call_operand.hbm [shape: f32[16,96], index: 3, kind: output, shape index: {}]
  %s4 = sld [smem:[#allocation0]]
  $region30: #{tpu_custom_call.1} parent=0
    _
  %s6 = ssub.s32 1, %s4
  %s7 = scalar_select 0, %s6, %s4
  $region1: #{tpu_custom_call.1} parent=0
    #allocation2 [shape = 'u8[8192]{0}', space=vmem, size = 0x2000, scoped, tag = 'input window, operand 0, single buffered']
    #allocation3 [shape = 's32[1]{0}', space=sflag, size = 0x4, scoped, tag = 'scoped memory for tpu_custom_call.1']
    #allocation4 [shape = 's32[1]{0}', space=sflag, size = 0x4, scoped, tag = 'scoped memory for tpu_custom_call.1']
    #allocation5 [shape = 'u8[16384]{0}', space=vmem, size = 0x4000, scoped, tag = 'input window, operand 1, single buffered']
    #allocation6 [shape = 's32[1]{0}', space=sflag, size = 0x4, scoped, tag = 'scoped memory for tpu_custom_call.1']
    #allocation7 [shape = 'u8[8192]{0}', space=vmem, size = 0x2000, scoped, tag = 'output window, operand 0, single buffered']
    %8 = vsyncpa [#allocation3], 0
    %9 = vsyncpa [#allocation6], 0
    %10 = vsyncpa [#allocation4], 0
    // Predicated region
    $region2: #{tpu_custom_call.1} parent=1 // pred_check
      _
    $region3: #{tpu_custom_call.1} parent=1 // pred_check_branch
      %12 = sbr.rel (0) target = $region5
    $region4: #{tpu_custom_call.1} parent=1 // pred_region
      %s14 = ssub.s32 256, 256
      %15 = vsyncadd [#allocation3], %s14
      %s16 = sshll.u32 [#allocation2], 4
      %s17 = int_to_ptr.vmem [resolvable:$true] %s16
      %22 = dma.hbm_to_vmem [thread:$0]  %s0, 256, %s17, [#allocation3], 128, 128, 8
    $region5: #{tpu_custom_call.1} parent=1 // pred_fallthru
      _
    // Predicated region
    $region6: #{tpu_custom_call.1} parent=1 // pred_check
      _
    $region7: #{tpu_custom_call.1} parent=1 // pred_check_branch
      %24 = sbr.rel (0) target = $region9
    $region8: #{tpu_custom_call.1} parent=1 // pred_region
      %s26 = ssub.s32 512, 512
      %27 = vsyncadd [#allocation6], %s26
      %s28 = sshll.u32 [#allocation5], 4
      %s29 = int_to_ptr.vmem [resolvable:$true] %s28
      %34 = dma.hbm_to_vmem [thread:$0]  %s1, 512, %s29, [#allocation6], 128, 128, 8
    $region9: #{tpu_custom_call.1} parent=1 // pred_fallthru
      _
    // Predicated region
    $region10: #{tpu_custom_call.1} parent=1 // pred_check
      _
    $region11: #{tpu_custom_call.1} parent=1 // pred_check_branch
      %36 = sbr.rel (0) target = $region13
    $region12: #{tpu_custom_call.1} parent=1 // pred_region
      _
    $region13: #{tpu_custom_call.1} parent=1 // pred_fallthru
      _
    // Predicated region
    $region14: #{tpu_custom_call.1} parent=1 // pred_check
      _
    $region15: #{tpu_custom_call.1} parent=1 // pred_check_branch
      %38 = sbr.rel (0) target = $region17
    $region16: #{tpu_custom_call.1} parent=1 // pred_region
      %39 = dma.done [#allocation3], 256
    $region17: #{tpu_custom_call.1} parent=1 // pred_fallthru
      _
    // Predicated region
    $region18: #{tpu_custom_call.1} parent=1 // pred_check
      _
    $region19: #{tpu_custom_call.1} parent=1 // pred_check_branch
      %41 = sbr.rel (0) target = $region21
    $region20: #{tpu_custom_call.1} parent=1 // pred_region
      %42 = dma.done [#allocation6], 512
    $region21: #{tpu_custom_call.1} parent=1 // pred_fallthru
      _
    %v43 = vld [vmem:[#allocation2] sm:$0xff]
    %v44 = vld [vmem:[#allocation2 + $0x8] sm:$0xff]
    %v45 = vld [vmem:[#allocation5] sm:$0xff]
    %v46 = vld [vmem:[#allocation5 + $0x8] sm:$0xff]
    %v47 = vld [vmem:[#allocation5 + $0x10] sm:$0xff]
    %v48 = vld [vmem:[#allocation5 + $0x18] sm:$0xff]
    %v49 = vld [vmem:[%s2] sm:$0x1]
    %v51 = vlaneseq
    %v52 = vshrl.u32 %v51, 7
    %v53 = vsub.s32 0, %v52
    %v54 = vrot.slane %v49, %v53
    %vm56 = vcmask 261120
    %v58 = vsel %vm56, %v43, 0
    %v61 = vsel %vm56, %v44, 0
    %63 = vmatprep.subr.mxu0 0.0
    %64 = vmatpush1.msra.mxu0 %v45
    %65 = vmatprep.subr.mxu0 0.0
    %66 = vmatpush1.msra.mxu0 %v46
    %67 = vmatprep.subr.mxu0 0.0
    %68 = vmatpush1.msra.mxu0 %v47
    %69 = vmatprep.subr.mxu0 0.0
    %70 = vmatpush1.msra.mxu0 %v48
    %71 = vmatprep.subr.mxu0 0.0
    %72 = vmatpush1.msra.mxu0 0.0
    %73 = vmatprep.subr.mxu0 0.0
    %74 = vmatpush1.msra.mxu0 0.0
    %75 = vmatprep.subr.mxu0 0.0
    %76 = vmatpush1.msra.mxu0 0.0
    %77 = vmatprep.subr.mxu0 0.0
    %78 = vmatpush1.msra.mxu0 0.0
    %79 = vmatprep.subr.mxu0 0.0
    %80 = vmatpush1.msra.mxu0 0.0
    %81 = vmatprep.subr.mxu0 0.0
    %82 = vmatpush1.msra.mxu0 0.0
    %83 = vmatprep.subr.mxu0 0.0
    %84 = vmatpush1.msra.mxu0 0.0
    %85 = vmatprep.subr.mxu0 0.0
    %86 = vmatpush1.msra.mxu0 0.0
    %87 = vmatprep.subr.mxu0 0.0
    %88 = vmatpush1.msra.mxu0 0.0
    %89 = vmatprep.subr.mxu0 0.0
    %90 = vmatpush1.msra.mxu0 0.0
    %91 = vmatprep.subr.mxu0 0.0
    %92 = vmatpush1.msra.mxu0 0.0
    %93 = vmatprep.subr.mxu0 0.0
    %94 = vmatpush1.msra.mxu0 0.0
    %95 = vmatprep.subr.mxu0 0.0
    %96 = vmatpush1.msra.mxu0 0.0
    %97 = vmatprep.subr.mxu0 0.0
    %98 = vmatpush1.msra.mxu0 0.0
    %99 = vmatprep.subr.mxu0 0.0
    %100 = vmatpush1.msra.mxu0 0.0
    %101 = vmatprep.subr.mxu0 0.0
    %102 = vmatpush1.msra.mxu0 0.0
    %103 = vmatprep.subr.mxu0 0.0
    %104 = vmatpush1.msra.mxu0 0.0
    %105 = vmatprep.subr.mxu0 0.0
    %106 = vmatpush1.msra.mxu0 0.0
    %107 = vmatprep.subr.mxu0 0.0
    %108 = vmatpush1.msra.mxu0 0.0
    %109 = vmatprep.subr.mxu0 0.0
    %110 = vmatpush1.msra.mxu0 0.0
    %111 = vmatprep.subr.mxu0 0.0
    %112 = vmatpush1.msra.mxu0 0.0
    %113 = vmatprep.subr.mxu0 0.0
    %114 = vmatpush1.msra.mxu0 0.0
    %115 = vmatprep.subr.mxu0 0.0
    %116 = vmatpush1.msra.mxu0 0.0
    %117 = vmatprep.subr.mxu0 0.0
    %118 = vmatpush1.msra.mxu0 0.0
    %119 = vmatprep.subr.mxu0 0.0
    %120 = vmatpush1.msra.mxu0 0.0
    %121 = vmatprep.subr.mxu0 0.0
    %122 = vmatpush1.msra.mxu0 0.0
    %123 = vmatprep.subr.mxu0 0.0
    %124 = vmatpush1.msra.mxu0 0.0
    %125 = vmatprep.subr.mxu0 0.0
    %126 = vmatpush1.msra.mxu0 0.0
    %127 = vmatprep.mubr.f32.mxu0 0.0
    %128 = vmatmul.mubr.f32.gmra.mrb[0].mxu0 %v58
    %v129 = vpop.f32.mrb[0].mxu0
    %v130 = vadd.f32 %v54, %v129
    %v131 = vpop.f32.mrb[0].mxu0
    %132 = vmatprep.mubr.f32.mxu0 0.0
    %133 = vmatmul.mubr.f32.gmra.mrb[0].mxu0 %v61
    %v134 = vpop.f32.mrb[0].mxu0
    %v135 = vadd.f32 %v54, %v134
    %v136 = vpop.f32.mrb[0].mxu0
    %137 = vdwg.mxu0
    %vm138 = vcmask 785408
    %139 = vst.msk [vmem:[#allocation7] sm:$0xff] %vm138, %v130
    %140 = vst.msk [vmem:[#allocation7 + $0x8] sm:$0xff] %vm138, %v135
    // Predicated region
    $region22: #{tpu_custom_call.1} parent=1 // pred_check
      _
    $region23: #{tpu_custom_call.1} parent=1 // pred_check_branch
      %142 = sbr.rel (0) target = $region25
    $region24: #{tpu_custom_call.1} parent=1 // pred_region
      %s144 = ssub.s32 256, 256
      %145 = vsyncadd [#allocation4], %s144
      %s146 = sshll.u32 [#allocation7], 4
      %s147 = int_to_ptr.vmem [resolvable:$true] %s146
      %152 = dma.vmem_to_hbm [thread:$0]  %s147, 256, %s3, [#allocation4], 128, 128, 8
    $region25: #{tpu_custom_call.1} parent=1 // pred_fallthru
      _
    // Predicated region
    $region26: #{tpu_custom_call.1} parent=1 // pred_check
      _
    $region27: #{tpu_custom_call.1} parent=1 // pred_check_branch
      %154 = sbr.rel (0) target = $region29
    $region28: #{tpu_custom_call.1} parent=1 // pred_region
      %155 = dma.done [#allocation4], 256
    $region29: #{tpu_custom_call.1} parent=1 // pred_fallthru
      _
    %156 = vsyncpa [#allocation3], 1
    %157 = vsyncpa [#allocation6], 1
    %158 = vsyncpa [#allocation4], 1

</llo_original>
